<compile_context>
chip_gen: v7x
topology: tpu7x:2x2x1
jax: 0.10.0
libtpu: 0.0.40
codegen_flags: <defaults>
</compile_context>

<pallas_src>
import functools

import jax
import jax.numpy as jnp
from jax import lax
from jax.experimental import pallas as pl
from jax.experimental.pallas import tpu as pltpu


def _rgb_decoder_kernel(a_ref, b_ref, x_ref, r_ref, o_ref):
    """out[:, c, :] = sigmoid( sum_k A[c,k]*x[:,k,:] + sum_k B[c,k]*r[:,k,:] ).

    a_ref: SMEM (3, 9) folded weights     b_ref: SMEM (3, 6) folded weights
    x_ref: VMEM (nb, 9, T) input pixels   r_ref: VMEM (nb, 6, T) ray pixels
    o_ref: VMEM (nb, 3, T) output pixels  (T on the lane axis, lane-dense)
    """
    n_in = x_ref.shape[1]    # 9
    n_ray = r_ref.shape[1]   # 6
    n_out = o_ref.shape[1]   # 3

    for c in range(n_out):
        # VPU broadcast-FMA: SMEM scalar * (nb, T) slab; accumulate in f32.
        acc = a_ref[c, 0] * x_ref[:, 0, :].astype(jnp.float32)
        for k in range(1, n_in):
            acc = acc + a_ref[c, k] * x_ref[:, k, :].astype(jnp.float32)
        for k in range(n_ray):
            acc = acc + b_ref[c, k] * r_ref[:, k, :].astype(jnp.float32)
        # sigmoid(x) == 0.5 * tanh(0.5 * x) + 0.5  (exact identity; EUP tanh,
        # no VALU divide). Garbage lanes in partial tiles stay bounded/NaN and
        # are discarded by the masked writeback.
        o_ref[:, c, :] = (0.5 * jnp.tanh(0.5 * acc) + 0.5).astype(o_ref.dtype)


@functools.partial(jax.jit, static_argnames=("tile_p",))
def rgb_decoder_vray_shift(inp, rays, params, tile_p=65536):
    """inp: (N, 9, H, W), rays: (N, 6, H, W)  ->  (N, 3, H, W) in inp.dtype.

    tile_p: pixels per grid step (lane axis).  65536 is a good default for
    v6e/v7x; on v7x with plenty of VMEM headroom 98304-131072 can be swept.
    """
    N, Cin, H, W = inp.shape
    Cr = rays.shape[1]
    assert Cin == 9 and Cr == 6
    HW = H * W
    out_dtype = inp.dtype

    # NCHW -> (N, C, H*W): pure reshape of contiguous data (no copy), native
    # dtype — no wrapper upcast; the f32 cast happens inside the kernel.
    x = inp.reshape(N, Cin, HW)
    r = rays.reshape(N, Cr, HW)

    # ---- Fold the all-linear chain into two tiny matrices (exact) ---------
    # PyTorch conv weights are (Cout, Cin, 1, 1).
    hi = lax.Precision.HIGHEST
    f32 = jnp.float32
    Wdw = params["dwconv1"].reshape(9, 9).astype(f32)
    W1 = params["mlp1"].reshape(3, 9).astype(f32)
    W2 = params["mlp2"].reshape(3, 15).astype(f32)
    W3 = params["mlp3"].reshape(3, 6).astype(f32)
    W2x, W2r = W2[:, :9], W2[:, 9:]
    W3a, W3s = W3[:, :3], W3[:, 3:]
    mixed = jnp.dot(W3a, W1, precision=hi) + jnp.dot(W3s, W2x, precision=hi)   # (3, 9)
    A = jnp.dot(mixed, Wdw + jnp.eye(9, dtype=f32), precision=hi)              # (3, 9)
    B = jnp.dot(W3s, W2r, precision=hi)                                        # (3, 6)

    # ---- Tiling ------------------------------------------------------------
    if HW >= tile_p:
        # Large images: one image per block, pixels tiled on the lane axis.
        tp = pl.cdiv(min(tile_p, HW), 128) * 128            # lane-aligned
        if N == 1:
            # keep >=2 grid steps so v7x megacore has something to split
            tp = min(tp, pl.cdiv(pl.cdiv(HW, 2), 128) * 128)
        grid = (N, pl.cdiv(HW, tp))
        idx = lambda b, j: (b, 0, j)
        x_spec = pl.BlockSpec((1, Cin, tp), idx)
        r_spec = pl.BlockSpec((1, Cr, tp), idx)
        o_spec = pl.BlockSpec((1, 3, tp), idx)
        semantics = ("parallel", "parallel")
    else:
        # Small images: pack several whole images per block so each step still
        # moves a large DMA (amortizes the ~0.35us/step overhead), but keep at
        # least 2 grid steps when N >= 2 for megacore sharding.
        nb = max(1, min(tile_p // max(HW, 1), pl.cdiv(N, 2), N))
        grid = (pl.cdiv(N, nb),)
        idx = lambda i: (i, 0, 0)
        x_spec = pl.BlockSpec((nb, Cin, HW), idx)
        r_spec = pl.BlockSpec((nb, Cr, HW), idx)
        o_spec = pl.BlockSpec((nb, 3, HW), idx)
        semantics = ("parallel",)

    bytes_per_pix = (Cin * jnp.dtype(inp.dtype).itemsize
                     + Cr * jnp.dtype(rays.dtype).itemsize
                     + 3 * jnp.dtype(out_dtype).itemsize)
    cost = pl.CostEstimate(
        flops=2 * 3 * (Cin + Cr) * N * HW,        # 45 MACs / pixel
        transcendentals=3 * N * HW,               # tanh per output channel
        bytes_accessed=bytes_per_pix * N * HW)

    # Folded weights live in SMEM: read as scalars for the broadcast-FMA.
    smem_spec = pl.BlockSpec(memory_space=pltpu.MemorySpace.SMEM)

    out = pl.pallas_call(
        _rgb_decoder_kernel,
        out_shape=jax.ShapeDtypeStruct((N, 3, HW), out_dtype),
        grid=grid,
        in_specs=[smem_spec, smem_spec, x_spec, r_spec],
        out_specs=o_spec,
        compiler_params=pltpu.CompilerParams(
            dimension_semantics=semantics,
            # ~20 MiB double-buffered footprint at tp=65536 (f32): above the
            # 16 MiB v5e scoped default, comfortably under 64 MiB v7x physical.
            vmem_limit_bytes=48 * 1024 * 1024),
        cost_estimate=cost,
    )(A, B, x, r)

    return out.reshape(N, 3, H, W)


def _reference(inp, rays, params):
    """Pure-JAX reference mirroring the PyTorch forward (NCHW, 1x1 convs)."""
    conv1x1 = lambda x, w: jnp.einsum(
        "nchw,oc->nohw", x, w.reshape(w.shape[0], w.shape[1]))
    x = conv1x1(inp, params["dwconv1"].reshape(9, 9)) + inp
    albedo = conv1x1(x, params["mlp1"].reshape(3, 9))
    spec = conv1x1(jnp.concatenate([x, rays], axis=1), params["mlp2"].reshape(3, 15))
    final = jnp.concatenate([albedo, spec], axis=1)
    return jax.nn.sigmoid(conv1x1(final, params["mlp3"].reshape(3, 6)))


def init_params(key):
    """Deterministic synthetic weights, shapes match nn.Conv2d(.., kernel=1, bias=False)."""
    k1, k2, k3, k4 = jax.random.split(key, 4)
    return {
        "mlp1": jax.random.normal(k1, (3, 9, 1, 1), jnp.float32) * 0.3,
        "mlp2": jax.random.normal(k2, (3, 15, 1, 1), jnp.float32) * 0.3,
        "mlp3": jax.random.normal(k3, (3, 6, 1, 1), jnp.float32) * 0.3,
        "dwconv1": jax.random.normal(k4, (9, 9, 1, 1), jnp.float32) * 0.3,
    }


if __name__ == "__main__":
    key = jax.random.PRNGKey(0)
    kp, ki, kr, ki2, kr2 = jax.random.split(key, 5)
    params = init_params(kp)

    # ---- Small-image (batched-block) path, f32 I/O -------------------------
    N, H, W = 2, 16, 16
    inp = jax.random.normal(ki, (N, 9, H, W), jnp.float32)
    rays = jax.random.normal(kr, (N, 6, H, W), jnp.float32)

    out = jax.block_until_ready(rgb_decoder_vray_shift(inp, rays, params))
    ref = _reference(inp, rays, params)
    assert out.shape == (N, 3, H, W)
    assert jnp.allclose(out, ref, atol=1e-5, rtol=1e-5), "mismatch (small f32)"

    # ---- Small-image path, bf16 streaming I/O ------------------------------
    inp_bf = inp.astype(jnp.bfloat16)
    rays_bf = rays.astype(jnp.bfloat16)
    out_bf = jax.block_until_ready(rgb_decoder_vray_shift(inp_bf, rays_bf, params))
    ref_bf = _reference(inp_bf.astype(jnp.float32), rays_bf.astype(jnp.float32), params)
    assert out_bf.dtype == jnp.bfloat16
    assert jnp.allclose(out_bf.astype(jnp.float32), ref_bf, atol=2e-2), "mismatch (bf16)"

    # ---- Large-image (pixel-tiled) path, f32 I/O ----------------------------
    N2, H2, W2 = 1, 256, 256                       # HW == 65536 -> lane tiling
    inp2 = jax.random.normal(ki2, (N2, 9, H2, W2), jnp.float32)
    rays2 = jax.random.normal(kr2, (N2, 6, H2, W2), jnp.float32)
    out2 = jax.block_until_ready(rgb_decoder_vray_shift(inp2, rays2, params))
    ref2 = _reference(inp2, rays2, params)
    assert out2.shape == (N2, 3, H2, W2)
    assert jnp.allclose(out2, ref2, atol=1e-5, rtol=1e-5), "mismatch (large f32)"

    print("KERNEL_OK")
</pallas_src>

<mosaic_0001>
module attributes {stable_mosaic.version = 11 : i64} {
  func.func @_rgb_decoder_kernel(%arg0: i32, %arg1: memref<3x9xf32, #tpu.memory_space<smem>>, %arg2: memref<3x6xf32, #tpu.memory_space<smem>>, %arg3: memref<1x9x256xf32, #tpu.memory_space<vmem>>, %arg4: memref<1x6x256xf32, #tpu.memory_space<vmem>>, %arg5: memref<1x3x256xf32, #tpu.memory_space<vmem>>) attributes {dimension_semantics = [#tpu.dimension_semantics<parallel>], iteration_bounds = array<i64: 2>, scalar_prefetch = 0 : i64, scratch_operands = 0 : i64, tpu.core_type = #tpu.core_type<tc>, window_params = [{transform_indices = @transform_0, window_bounds = array<i64: 3, 9>}, {transform_indices = @transform_1, window_bounds = array<i64: 3, 6>}, {transform_indices = @transform_2, window_bounds = array<i64: 1, 9, 256>}, {transform_indices = @transform_3, window_bounds = array<i64: 1, 6, 256>}, {transform_indices = @transform_4, window_bounds = array<i64: 1, 3, 256>}]} {
    %c0 = arith.constant 0 : index
    %c0_0 = arith.constant 0 : index
    %0 = memref.load %arg1[%c0, %c0_0] : memref<3x9xf32, #tpu.memory_space<smem>>
    %c0_1 = arith.constant 0 : index
    %c0_2 = arith.constant 0 : index
    %c0_3 = arith.constant 0 : index
    %1 = vector.load %arg3[%c0_1, %c0_2, %c0_3] : memref<1x9x256xf32, #tpu.memory_space<vmem>>, vector<1x1x256xf32>
    %2 = vector.shape_cast %1 : vector<1x1x256xf32> to vector<1x256xf32>
    %3 = vector.broadcast %0 : f32 to vector<1x256xf32>
    %4 = arith.mulf %3, %2 : vector<1x256xf32>
    %c0_4 = arith.constant 0 : index
    %c1 = arith.constant 1 : index
    %5 = memref.load %arg1[%c0_4, %c1] : memref<3x9xf32, #tpu.memory_space<smem>>
    %c0_5 = arith.constant 0 : index
    %c1_6 = arith.constant 1 : index
    %c0_7 = arith.constant 0 : index
    %6 = vector.load %arg3[%c0_5, %c1_6, %c0_7] : memref<1x9x256xf32, #tpu.memory_space<vmem>>, vector<1x1x256xf32>
    %7 = vector.shape_cast %6 : vector<1x1x256xf32> to vector<1x256xf32>
    %8 = vector.broadcast %5 : f32 to vector<1x256xf32>
    %9 = arith.mulf %8, %7 : vector<1x256xf32>
    %10 = arith.addf %4, %9 : vector<1x256xf32>
    %c0_8 = arith.constant 0 : index
    %c2 = arith.constant 2 : index
    %11 = memref.load %arg1[%c0_8, %c2] : memref<3x9xf32, #tpu.memory_space<smem>>
    %c0_9 = arith.constant 0 : index
    %c2_10 = arith.constant 2 : index
    %c0_11 = arith.constant 0 : index
    %12 = vector.load %arg3[%c0_9, %c2_10, %c0_11] : memref<1x9x256xf32, #tpu.memory_space<vmem>>, vector<1x1x256xf32>
    %13 = vector.shape_cast %12 : vector<1x1x256xf32> to vector<1x256xf32>
    %14 = vector.broadcast %11 : f32 to vector<1x256xf32>
    %15 = arith.mulf %14, %13 : vector<1x256xf32>
    %16 = arith.addf %10, %15 : vector<1x256xf32>
    %c0_12 = arith.constant 0 : index
    %c3 = arith.constant 3 : index
    %17 = memref.load %arg1[%c0_12, %c3] : memref<3x9xf32, #tpu.memory_space<smem>>
    %c0_13 = arith.constant 0 : index
    %c3_14 = arith.constant 3 : index
    %c0_15 = arith.constant 0 : index
    %18 = vector.load %arg3[%c0_13, %c3_14, %c0_15] : memref<1x9x256xf32, #tpu.memory_space<vmem>>, vector<1x1x256xf32>
    %19 = vector.shape_cast %18 : vector<1x1x256xf32> to vector<1x256xf32>
    %20 = vector.broadcast %17 : f32 to vector<1x256xf32>
    %21 = arith.mulf %20, %19 : vector<1x256xf32>
    %22 = arith.addf %16, %21 : vector<1x256xf32>
    %c0_16 = arith.constant 0 : index
    %c4 = arith.constant 4 : index
    %23 = memref.load %arg1[%c0_16, %c4] : memref<3x9xf32, #tpu.memory_space<smem>>
    %c0_17 = arith.constant 0 : index
    %c4_18 = arith.constant 4 : index
    %c0_19 = arith.constant 0 : index
    %24 = vector.load %arg3[%c0_17, %c4_18, %c0_19] : memref<1x9x256xf32, #tpu.memory_space<vmem>>, vector<1x1x256xf32>
    %25 = vector.shape_cast %24 : vector<1x1x256xf32> to vector<1x256xf32>
    %26 = vector.broadcast %23 : f32 to vector<1x256xf32>
    %27 = arith.mulf %26, %25 : vector<1x256xf32>
    %28 = arith.addf %22, %27 : vector<1x256xf32>
    %c0_20 = arith.constant 0 : index
    %c5 = arith.constant 5 : index
    %29 = memref.load %arg1[%c0_20, %c5] : memref<3x9xf32, #tpu.memory_space<smem>>
    %c0_21 = arith.constant 0 : index
    %c5_22 = arith.constant 5 : index
    %c0_23 = arith.constant 0 : index
    %30 = vector.load %arg3[%c0_21, %c5_22, %c0_23] : memref<1x9x256xf32, #tpu.memory_space<vmem>>, vector<1x1x256xf32>
    %31 = vector.shape_cast %30 : vector<1x1x256xf32> to vector<1x256xf32>
    %32 = vector.broadcast %29 : f32 to vector<1x256xf32>
    %33 = arith.mulf %32, %31 : vector<1x256xf32>
    %34 = arith.addf %28, %33 : vector<1x256xf32>
    %c0_24 = arith.constant 0 : index
    %c6 = arith.constant 6 : index
    %35 = memref.load %arg1[%c0_24, %c6] : memref<3x9xf32, #tpu.memory_space<smem>>
    %c0_25 = arith.constant 0 : index
    %c6_26 = arith.constant 6 : index
    %c0_27 = arith.constant 0 : index
    %36 = vector.load %arg3[%c0_25, %c6_26, %c0_27] : memref<1x9x256xf32, #tpu.memory_space<vmem>>, vector<1x1x256xf32>
    %37 = vector.shape_cast %36 : vector<1x1x256xf32> to vector<1x256xf32>
    %38 = vector.broadcast %35 : f32 to vector<1x256xf32>
    %39 = arith.mulf %38, %37 : vector<1x256xf32>
    %40 = arith.addf %34, %39 : vector<1x256xf32>
    %c0_28 = arith.constant 0 : index
    %c7 = arith.constant 7 : index
    %41 = memref.load %arg1[%c0_28, %c7] : memref<3x9xf32, #tpu.memory_space<smem>>
    %c0_29 = arith.constant 0 : index
    %c7_30 = arith.constant 7 : index
    %c0_31 = arith.constant 0 : index
    %42 = vector.load %arg3[%c0_29, %c7_30, %c0_31] : memref<1x9x256xf32, #tpu.memory_space<vmem>>, vector<1x1x256xf32>
    %43 = vector.shape_cast %42 : vector<1x1x256xf32> to vector<1x256xf32>
    %44 = vector.broadcast %41 : f32 to vector<1x256xf32>
    %45 = arith.mulf %44, %43 : vector<1x256xf32>
    %46 = arith.addf %40, %45 : vector<1x256xf32>
    %c0_32 = arith.constant 0 : index
    %c8 = arith.constant 8 : index
    %47 = memref.load %arg1[%c0_32, %c8] : memref<3x9xf32, #tpu.memory_space<smem>>
    %c0_33 = arith.constant 0 : index
    %c8_34 = arith.constant 8 : index
    %c0_35 = arith.constant 0 : index
    %48 = vector.load %arg3[%c0_33, %c8_34, %c0_35] : memref<1x9x256xf32, #tpu.memory_space<vmem>>, vector<1x1x256xf32>
    %49 = vector.shape_cast %48 : vector<1x1x256xf32> to vector<1x256xf32>
    %50 = vector.broadcast %47 : f32 to vector<1x256xf32>
    %51 = arith.mulf %50, %49 : vector<1x256xf32>
    %52 = arith.addf %46, %51 : vector<1x256xf32>
    %c0_36 = arith.constant 0 : index
    %c0_37 = arith.constant 0 : index
    %53 = memref.load %arg2[%c0_36, %c0_37] : memref<3x6xf32, #tpu.memory_space<smem>>
    %c0_38 = arith.constant 0 : index
    %c0_39 = arith.constant 0 : index
    %c0_40 = arith.constant 0 : index
    %54 = vector.load %arg4[%c0_38, %c0_39, %c0_40] : memref<1x6x256xf32, #tpu.memory_space<vmem>>, vector<1x1x256xf32>
    %55 = vector.shape_cast %54 : vector<1x1x256xf32> to vector<1x256xf32>
    %56 = vector.broadcast %53 : f32 to vector<1x256xf32>
    %57 = arith.mulf %56, %55 : vector<1x256xf32>
    %58 = arith.addf %52, %57 : vector<1x256xf32>
    %c0_41 = arith.constant 0 : index
    %c1_42 = arith.constant 1 : index
    %59 = memref.load %arg2[%c0_41, %c1_42] : memref<3x6xf32, #tpu.memory_space<smem>>
    %c0_43 = arith.constant 0 : index
    %c1_44 = arith.constant 1 : index
    %c0_45 = arith.constant 0 : index
    %60 = vector.load %arg4[%c0_43, %c1_44, %c0_45] : memref<1x6x256xf32, #tpu.memory_space<vmem>>, vector<1x1x256xf32>
    %61 = vector.shape_cast %60 : vector<1x1x256xf32> to vector<1x256xf32>
    %62 = vector.broadcast %59 : f32 to vector<1x256xf32>
    %63 = arith.mulf %62, %61 : vector<1x256xf32>
    %64 = arith.addf %58, %63 : vector<1x256xf32>
    %c0_46 = arith.constant 0 : index
    %c2_47 = arith.constant 2 : index
    %65 = memref.load %arg2[%c0_46, %c2_47] : memref<3x6xf32, #tpu.memory_space<smem>>
    %c0_48 = arith.constant 0 : index
    %c2_49 = arith.constant 2 : index
    %c0_50 = arith.constant 0 : index
    %66 = vector.load %arg4[%c0_48, %c2_49, %c0_50] : memref<1x6x256xf32, #tpu.memory_space<vmem>>, vector<1x1x256xf32>
    %67 = vector.shape_cast %66 : vector<1x1x256xf32> to vector<1x256xf32>
    %68 = vector.broadcast %65 : f32 to vector<1x256xf32>
    %69 = arith.mulf %68, %67 : vector<1x256xf32>
    %70 = arith.addf %64, %69 : vector<1x256xf32>
    %c0_51 = arith.constant 0 : index
    %c3_52 = arith.constant 3 : index
    %71 = memref.load %arg2[%c0_51, %c3_52] : memref<3x6xf32, #tpu.memory_space<smem>>
    %c0_53 = arith.constant 0 : index
    %c3_54 = arith.constant 3 : index
    %c0_55 = arith.constant 0 : index
    %72 = vector.load %arg4[%c0_53, %c3_54, %c0_55] : memref<1x6x256xf32, #tpu.memory_space<vmem>>, vector<1x1x256xf32>
    %73 = vector.shape_cast %72 : vector<1x1x256xf32> to vector<1x256xf32>
    %74 = vector.broadcast %71 : f32 to vector<1x256xf32>
    %75 = arith.mulf %74, %73 : vector<1x256xf32>
    %76 = arith.addf %70, %75 : vector<1x256xf32>
    %c0_56 = arith.constant 0 : index
    %c4_57 = arith.constant 4 : index
    %77 = memref.load %arg2[%c0_56, %c4_57] : memref<3x6xf32, #tpu.memory_space<smem>>
    %c0_58 = arith.constant 0 : index
    %c4_59 = arith.constant 4 : index
    %c0_60 = arith.constant 0 : index
    %78 = vector.load %arg4[%c0_58, %c4_59, %c0_60] : memref<1x6x256xf32, #tpu.memory_space<vmem>>, vector<1x1x256xf32>
    %79 = vector.shape_cast %78 : vector<1x1x256xf32> to vector<1x256xf32>
    %80 = vector.broadcast %77 : f32 to vector<1x256xf32>
    %81 = arith.mulf %80, %79 : vector<1x256xf32>
    %82 = arith.addf %76, %81 : vector<1x256xf32>
    %c0_61 = arith.constant 0 : index
    %c5_62 = arith.constant 5 : index
    %83 = memref.load %arg2[%c0_61, %c5_62] : memref<3x6xf32, #tpu.memory_space<smem>>
    %c0_63 = arith.constant 0 : index
    %c5_64 = arith.constant 5 : index
    %c0_65 = arith.constant 0 : index
    %84 = vector.load %arg4[%c0_63, %c5_64, %c0_65] : memref<1x6x256xf32, #tpu.memory_space<vmem>>, vector<1x1x256xf32>
    %85 = vector.shape_cast %84 : vector<1x1x256xf32> to vector<1x256xf32>
    %86 = vector.broadcast %83 : f32 to vector<1x256xf32>
    %87 = arith.mulf %86, %85 : vector<1x256xf32>
    %88 = arith.addf %82, %87 : vector<1x256xf32>
    %cst = arith.constant 5.000000e-01 : f32
    %89 = vector.broadcast %cst : f32 to vector<1x256xf32>
    %90 = arith.mulf %89, %88 : vector<1x256xf32>
    %91 = math.tanh %90 : vector<1x256xf32>
    %cst_66 = arith.constant 5.000000e-01 : f32
    %92 = vector.broadcast %cst_66 : f32 to vector<1x256xf32>
    %93 = arith.mulf %92, %91 : vector<1x256xf32>
    %cst_67 = arith.constant 5.000000e-01 : f32
    %94 = vector.broadcast %cst_67 : f32 to vector<1x256xf32>
    %95 = arith.addf %93, %94 : vector<1x256xf32>
    %c0_68 = arith.constant 0 : index
    %c0_69 = arith.constant 0 : index
    %c0_70 = arith.constant 0 : index
    %96 = vector.load %arg5[%c0_68, %c0_69, %c0_70] : memref<1x3x256xf32, #tpu.memory_space<vmem>>, vector<1x1x256xf32>
    %97 = vector.shape_cast %96 : vector<1x1x256xf32> to vector<1x256xf32>
    %98 = vector.shape_cast %95 : vector<1x256xf32> to vector<1x1x256xf32>
    tpu.vector_store %arg5[%c0_68, %c0_69, %c0_70], %98 {strides = array<i32>} : memref<1x3x256xf32, #tpu.memory_space<vmem>>, vector<1x1x256xf32>,
    %c1_71 = arith.constant 1 : index
    %c0_72 = arith.constant 0 : index
    %99 = memref.load %arg1[%c1_71, %c0_72] : memref<3x9xf32, #tpu.memory_space<smem>>
    %c0_73 = arith.constant 0 : index
    %c0_74 = arith.constant 0 : index
    %c0_75 = arith.constant 0 : index
    %100 = vector.load %arg3[%c0_73, %c0_74, %c0_75] : memref<1x9x256xf32, #tpu.memory_space<vmem>>, vector<1x1x256xf32>
    %101 = vector.shape_cast %100 : vector<1x1x256xf32> to vector<1x256xf32>
    %102 = vector.broadcast %99 : f32 to vector<1x256xf32>
    %103 = arith.mulf %102, %101 : vector<1x256xf32>
    %c1_76 = arith.constant 1 : index
    %c1_77 = arith.constant 1 : index
    %104 = memref.load %arg1[%c1_76, %c1_77] : memref<3x9xf32, #tpu.memory_space<smem>>
    %c0_78 = arith.constant 0 : index
    %c1_79 = arith.constant 1 : index
    %c0_80 = arith.constant 0 : index
    %105 = vector.load %arg3[%c0_78, %c1_79, %c0_80] : memref<1x9x256xf32, #tpu.memory_space<vmem>>, vector<1x1x256xf32>
    %106 = vector.shape_cast %105 : vector<1x1x256xf32> to vector<1x256xf32>
    %107 = vector.broadcast %104 : f32 to vector<1x256xf32>
    %108 = arith.mulf %107, %106 : vector<1x256xf32>
    %109 = arith.addf %103, %108 : vector<1x256xf32>
    %c1_81 = arith.constant 1 : index
    %c2_82 = arith.constant 2 : index
    %110 = memref.load %arg1[%c1_81, %c2_82] : memref<3x9xf32, #tpu.memory_space<smem>>
    %c0_83 = arith.constant 0 : index
    %c2_84 = arith.constant 2 : index
    %c0_85 = arith.constant 0 : index
    %111 = vector.load %arg3[%c0_83, %c2_84, %c0_85] : memref<1x9x256xf32, #tpu.memory_space<vmem>>, vector<1x1x256xf32>
    %112 = vector.shape_cast %111 : vector<1x1x256xf32> to vector<1x256xf32>
    %113 = vector.broadcast %110 : f32 to vector<1x256xf32>
    %114 = arith.mulf %113, %112 : vector<1x256xf32>
    %115 = arith.addf %109, %114 : vector<1x256xf32>
    %c1_86 = arith.constant 1 : index
    %c3_87 = arith.constant 3 : index
    %116 = memref.load %arg1[%c1_86, %c3_87] : memref<3x9xf32, #tpu.memory_space<smem>>
    %c0_88 = arith.constant 0 : index
    %c3_89 = arith.constant 3 : index
    %c0_90 = arith.constant 0 : index
    %117 = vector.load %arg3[%c0_88, %c3_89, %c0_90] : memref<1x9x256xf32, #tpu.memory_space<vmem>>, vector<1x1x256xf32>
    %118 = vector.shape_cast %117 : vector<1x1x256xf32> to vector<1x256xf32>
    %119 = vector.broadcast %116 : f32 to vector<1x256xf32>
    %120 = arith.mulf %119, %118 : vector<1x256xf32>
    %121 = arith.addf %115, %120 : vector<1x256xf32>
    %c1_91 = arith.constant 1 : index
    %c4_92 = arith.constant 4 : index
    %122 = memref.load %arg1[%c1_91, %c4_92] : memref<3x9xf32, #tpu.memory_space<smem>>
    %c0_93 = arith.constant 0 : index
    %c4_94 = arith.constant 4 : index
    %c0_95 = arith.constant 0 : index
    %123 = vector.load %arg3[%c0_93, %c4_94, %c0_95] : memref<1x9x256xf32, #tpu.memory_space<vmem>>, vector<1x1x256xf32>
    %124 = vector.shape_cast %123 : vector<1x1x256xf32> to vector<1x256xf32>
    %125 = vector.broadcast %122 : f32 to vector<1x256xf32>
    %126 = arith.mulf %125, %124 : vector<1x256xf32>
    %127 = arith.addf %121, %126 : vector<1x256xf32>
    %c1_96 = arith.constant 1 : index
    %c5_97 = arith.constant 5 : index
    %128 = memref.load %arg1[%c1_96, %c5_97] : memref<3x9xf32, #tpu.memory_space<smem>>
    %c0_98 = arith.constant 0 : index
    %c5_99 = arith.constant 5 : index
    %c0_100 = arith.constant 0 : index
    %129 = vector.load %arg3[%c0_98, %c5_99, %c0_100] : memref<1x9x256xf32, #tpu.memory_space<vmem>>, vector<1x1x256xf32>
    %130 = vector.shape_cast %129 : vector<1x1x256xf32> to vector<1x256xf32>
    %131 = vector.broadcast %128 : f32 to vector<1x256xf32>
    %132 = arith.mulf %131, %130 : vector<1x256xf32>
    %133 = arith.addf %127, %132 : vector<1x256xf32>
    %c1_101 = arith.constant 1 : index
    %c6_102 = arith.constant 6 : index
    %134 = memref.load %arg1[%c1_101, %c6_102] : memref<3x9xf32, #tpu.memory_space<smem>>
    %c0_103 = arith.constant 0 : index
    %c6_104 = arith.constant 6 : index
    %c0_105 = arith.constant 0 : index
    %135 = vector.load %arg3[%c0_103, %c6_104, %c0_105] : memref<1x9x256xf32, #tpu.memory_space<vmem>>, vector<1x1x256xf32>
    %136 = vector.shape_cast %135 : vector<1x1x256xf32> to vector<1x256xf32>
    %137 = vector.broadcast %134 : f32 to vector<1x256xf32>
    %138 = arith.mulf %137, %136 : vector<1x256xf32>
    %139 = arith.addf %133, %138 : vector<1x256xf32>
    %c1_106 = arith.constant 1 : index
    %c7_107 = arith.constant 7 : index
    %140 = memref.load %arg1[%c1_106, %c7_107] : memref<3x9xf32, #tpu.memory_space<smem>>
    %c0_108 = arith.constant 0 : index
    %c7_109 = arith.constant 7 : index
    %c0_110 = arith.constant 0 : index
    %141 = vector.load %arg3[%c0_108, %c7_109, %c0_110] : memref<1x9x256xf32, #tpu.memory_space<vmem>>, vector<1x1x256xf32>
    %142 = vector.shape_cast %141 : vector<1x1x256xf32> to vector<1x256xf32>
    %143 = vector.broadcast %140 : f32 to vector<1x256xf32>
    %144 = arith.mulf %143, %142 : vector<1x256xf32>
    %145 = arith.addf %139, %144 : vector<1x256xf32>
    %c1_111 = arith.constant 1 : index
    %c8_112 = arith.constant 8 : index
    %146 = memref.load %arg1[%c1_111, %c8_112] : memref<3x9xf32, #tpu.memory_space<smem>>
    %c0_113 = arith.constant 0 : index
    %c8_114 = arith.constant 8 : index
    %c0_115 = arith.constant 0 : index
    %147 = vector.load %arg3[%c0_113, %c8_114, %c0_115] : memref<1x9x256xf32, #tpu.memory_space<vmem>>, vector<1x1x256xf32>
    %148 = vector.shape_cast %147 : vector<1x1x256xf32> to vector<1x256xf32>
    %149 = vector.broadcast %146 : f32 to vector<1x256xf32>
    %150 = arith.mulf %149, %148 : vector<1x256xf32>
    %151 = arith.addf %145, %150 : vector<1x256xf32>
    %c1_116 = arith.constant 1 : index
    %c0_117 = arith.constant 0 : index
    %152 = memref.load %arg2[%c1_116, %c0_117] : memref<3x6xf32, #tpu.memory_space<smem>>
    %c0_118 = arith.constant 0 : index
    %c0_119 = arith.constant 0 : index
    %c0_120 = arith.constant 0 : index
    %153 = vector.load %arg4[%c0_118, %c0_119, %c0_120] : memref<1x6x256xf32, #tpu.memory_space<vmem>>, vector<1x1x256xf32>
    %154 = vector.shape_cast %153 : vector<1x1x256xf32> to vector<1x256xf32>
    %155 = vector.broadcast %152 : f32 to vector<1x256xf32>
    %156 = arith.mulf %155, %154 : vector<1x256xf32>
    %157 = arith.addf %151, %156 : vector<1x256xf32>
    %c1_121 = arith.constant 1 : index
    %c1_122 = arith.constant 1 : index
    %158 = memref.load %arg2[%c1_121, %c1_122] : memref<3x6xf32, #tpu.memory_space<smem>>
    %c0_123 = arith.constant 0 : index
    %c1_124 = arith.constant 1 : index
    %c0_125 = arith.constant 0 : index
    %159 = vector.load %arg4[%c0_123, %c1_124, %c0_125] : memref<1x6x256xf32, #tpu.memory_space<vmem>>, vector<1x1x256xf32>
    %160 = vector.shape_cast %159 : vector<1x1x256xf32> to vector<1x256xf32>
    %161 = vector.broadcast %158 : f32 to vector<1x256xf32>
    %162 = arith.mulf %161, %160 : vector<1x256xf32>
    %163 = arith.addf %157, %162 : vector<1x256xf32>
    %c1_126 = arith.constant 1 : index
    %c2_127 = arith.constant 2 : index
    %164 = memref.load %arg2[%c1_126, %c2_127] : memref<3x6xf32, #tpu.memory_space<smem>>
    %c0_128 = arith.constant 0 : index
    %c2_129 = arith.constant 2 : index
    %c0_130 = arith.constant 0 : index
    %165 = vector.load %arg4[%c0_128, %c2_129, %c0_130] : memref<1x6x256xf32, #tpu.memory_space<vmem>>, vector<1x1x256xf32>
    %166 = vector.shape_cast %165 : vector<1x1x256xf32> to vector<1x256xf32>
    %167 = vector.broadcast %164 : f32 to vector<1x256xf32>
    %168 = arith.mulf %167, %166 : vector<1x256xf32>
    %169 = arith.addf %163, %168 : vector<1x256xf32>
    %c1_131 = arith.constant 1 : index
    %c3_132 = arith.constant 3 : index
    %170 = memref.load %arg2[%c1_131, %c3_132] : memref<3x6xf32, #tpu.memory_space<smem>>
    %c0_133 = arith.constant 0 : index
    %c3_134 = arith.constant 3 : index
    %c0_135 = arith.constant 0 : index
    %171 = vector.load %arg4[%c0_133, %c3_134, %c0_135] : memref<1x6x256xf32, #tpu.memory_space<vmem>>, vector<1x1x256xf32>
    %172 = vector.shape_cast %171 : vector<1x1x256xf32> to vector<1x256xf32>
    %173 = vector.broadcast %170 : f32 to vector<1x256xf32>
    %174 = arith.mulf %173, %172 : vector<1x256xf32>
    %175 = arith.addf %169, %174 : vector<1x256xf32>
    %c1_136 = arith.constant 1 : index
    %c4_137 = arith.constant 4 : index
    %176 = memref.load %arg2[%c1_136, %c4_137] : memref<3x6xf32, #tpu.memory_space<smem>>
    %c0_138 = arith.constant 0 : index
    %c4_139 = arith.constant 4 : index
    %c0_140 = arith.constant 0 : index
    %177 = vector.load %arg4[%c0_138, %c4_139, %c0_140] : memref<1x6x256xf32, #tpu.memory_space<vmem>>, vector<1x1x256xf32>
    %178 = vector.shape_cast %177 : vector<1x1x256xf32> to vector<1x256xf32>
    %179 = vector.broadcast %176 : f32 to vector<1x256xf32>
    %180 = arith.mulf %179, %178 : vector<1x256xf32>
    %181 = arith.addf %175, %180 : vector<1x256xf32>
    %c1_141 = arith.constant 1 : index
    %c5_142 = arith.constant 5 : index
    %182 = memref.load %arg2[%c1_141, %c5_142] : memref<3x6xf32, #tpu.memory_space<smem>>
    %c0_143 = arith.constant 0 : index
    %c5_144 = arith.constant 5 : index
    %c0_145 = arith.constant 0 : index
    %183 = vector.load %arg4[%c0_143, %c5_144, %c0_145] : memref<1x6x256xf32, #tpu.memory_space<vmem>>, vector<1x1x256xf32>
    %184 = vector.shape_cast %183 : vector<1x1x256xf32> to vector<1x256xf32>
    %185 = vector.broadcast %182 : f32 to vector<1x256xf32>
    %186 = arith.mulf %185, %184 : vector<1x256xf32>
    %187 = arith.addf %181, %186 : vector<1x256xf32>
    %cst_146 = arith.constant 5.000000e-01 : f32
    %188 = vector.broadcast %cst_146 : f32 to vector<1x256xf32>
    %189 = arith.mulf %188, %187 : vector<1x256xf32>
    %190 = math.tanh %189 : vector<1x256xf32>
    %cst_147 = arith.constant 5.000000e-01 : f32
    %191 = vector.broadcast %cst_147 : f32 to vector<1x256xf32>
    %192 = arith.mulf %191, %190 : vector<1x256xf32>
    %cst_148 = arith.constant 5.000000e-01 : f32
    %193 = vector.broadcast %cst_148 : f32 to vector<1x256xf32>
    %194 = arith.addf %192, %193 : vector<1x256xf32>
    %c0_149 = arith.constant 0 : index
    %c1_150 = arith.constant 1 : index
    %c0_151 = arith.constant 0 : index
    %195 = vector.load %arg5[%c0_149, %c1_150, %c0_151] : memref<1x3x256xf32, #tpu.memory_space<vmem>>, vector<1x1x256xf32>
    %196 = vector.shape_cast %195 : vector<1x1x256xf32> to vector<1x256xf32>
    %197 = vector.shape_cast %194 : vector<1x256xf32> to vector<1x1x256xf32>
    tpu.vector_store %arg5[%c0_149, %c1_150, %c0_151], %197 {strides = array<i32>} : memref<1x3x256xf32, #tpu.memory_space<vmem>>, vector<1x1x256xf32>,
    %c2_152 = arith.constant 2 : index
    %c0_153 = arith.constant 0 : index
    %198 = memref.load %arg1[%c2_152, %c0_153] : memref<3x9xf32, #tpu.memory_space<smem>>
    %c0_154 = arith.constant 0 : index
    %c0_155 = arith.constant 0 : index
    %c0_156 = arith.constant 0 : index
    %199 = vector.load %arg3[%c0_154, %c0_155, %c0_156] : memref<1x9x256xf32, #tpu.memory_space<vmem>>, vector<1x1x256xf32>
    %200 = vector.shape_cast %199 : vector<1x1x256xf32> to vector<1x256xf32>
    %201 = vector.broadcast %198 : f32 to vector<1x256xf32>
    %202 = arith.mulf %201, %200 : vector<1x256xf32>
    %c2_157 = arith.constant 2 : index
    %c1_158 = arith.constant 1 : index
    %203 = memref.load %arg1[%c2_157, %c1_158] : memref<3x9xf32, #tpu.memory_space<smem>>
    %c0_159 = arith.constant 0 : index
    %c1_160 = arith.constant 1 : index
    %c0_161 = arith.constant 0 : index
    %204 = vector.load %arg3[%c0_159, %c1_160, %c0_161] : memref<1x9x256xf32, #tpu.memory_space<vmem>>, vector<1x1x256xf32>
    %205 = vector.shape_cast %204 : vector<1x1x256xf32> to vector<1x256xf32>
    %206 = vector.broadcast %203 : f32 to vector<1x256xf32>
    %207 = arith.mulf %206, %205 : vector<1x256xf32>
    %208 = arith.addf %202, %207 : vector<1x256xf32>
    %c2_162 = arith.constant 2 : index
    %c2_163 = arith.constant 2 : index
    %209 = memref.load %arg1[%c2_162, %c2_163] : memref<3x9xf32, #tpu.memory_space<smem>>
    %c0_164 = arith.constant 0 : index
    %c2_165 = arith.constant 2 : index
    %c0_166 = arith.constant 0 : index
    %210 = vector.load %arg3[%c0_164, %c2_165, %c0_166] : memref<1x9x256xf32, #tpu.memory_space<vmem>>, vector<1x1x256xf32>
    %211 = vector.shape_cast %210 : vector<1x1x256xf32> to vector<1x256xf32>
    %212 = vector.broadcast %209 : f32 to vector<1x256xf32>
    %213 = arith.mulf %212, %211 : vector<1x256xf32>
    %214 = arith.addf %208, %213 : vector<1x256xf32>
    %c2_167 = arith.constant 2 : index
    %c3_168 = arith.constant 3 : index
    %215 = memref.load %arg1[%c2_167, %c3_168] : memref<3x9xf32, #tpu.memory_space<smem>>
    %c0_169 = arith.constant 0 : index
    %c3_170 = arith.constant 3 : index
    %c0_171 = arith.constant 0 : index
    %216 = vector.load %arg3[%c0_169, %c3_170, %c0_171] : memref<1x9x256xf32, #tpu.memory_space<vmem>>, vector<1x1x256xf32>
    %217 = vector.shape_cast %216 : vector<1x1x256xf32> to vector<1x256xf32>
    %218 = vector.broadcast %215 : f32 to vector<1x256xf32>
    %219 = arith.mulf %218, %217 : vector<1x256xf32>
    %220 = arith.addf %214, %219 : vector<1x256xf32>
    %c2_172 = arith.constant 2 : index
    %c4_173 = arith.constant 4 : index
    %221 = memref.load %arg1[%c2_172, %c4_173] : memref<3x9xf32, #tpu.memory_space<smem>>
    %c0_174 = arith.constant 0 : index
    %c4_175 = arith.constant 4 : index
    %c0_176 = arith.constant 0 : index
    %222 = vector.load %arg3[%c0_174, %c4_175, %c0_176] : memref<1x9x256xf32, #tpu.memory_space<vmem>>, vector<1x1x256xf32>
    %223 = vector.shape_cast %222 : vector<1x1x256xf32> to vector<1x256xf32>
    %224 = vector.broadcast %221 : f32 to vector<1x256xf32>
    %225 = arith.mulf %224, %223 : vector<1x256xf32>
    %226 = arith.addf %220, %225 : vector<1x256xf32>
    %c2_177 = arith.constant 2 : index
    %c5_178 = arith.constant 5 : index
    %227 = memref.load %arg1[%c2_177, %c5_178] : memref<3x9xf32, #tpu.memory_space<smem>>
    %c0_179 = arith.constant 0 : index
    %c5_180 = arith.constant 5 : index
    %c0_181 = arith.constant 0 : index
    %228 = vector.load %arg3[%c0_179, %c5_180, %c0_181] : memref<1x9x256xf32, #tpu.memory_space<vmem>>, vector<1x1x256xf32>
    %229 = vector.shape_cast %228 : vector<1x1x256xf32> to vector<1x256xf32>
    %230 = vector.broadcast %227 : f32 to vector<1x256xf32>
    %231 = arith.mulf %230, %229 : vector<1x256xf32>
    %232 = arith.addf %226, %231 : vector<1x256xf32>
    %c2_182 = arith.constant 2 : index
    %c6_183 = arith.constant 6 : index
    %233 = memref.load %arg1[%c2_182, %c6_183] : memref<3x9xf32, #tpu.memory_space<smem>>
    %c0_184 = arith.constant 0 : index
    %c6_185 = arith.constant 6 : index
    %c0_186 = arith.constant 0 : index
    %234 = vector.load %arg3[%c0_184, %c6_185, %c0_186] : memref<1x9x256xf32, #tpu.memory_space<vmem>>, vector<1x1x256xf32>
    %235 = vector.shape_cast %234 : vector<1x1x256xf32> to vector<1x256xf32>
    %236 = vector.broadcast %233 : f32 to vector<1x256xf32>
    %237 = arith.mulf %236, %235 : vector<1x256xf32>
    %238 = arith.addf %232, %237 : vector<1x256xf32>
    %c2_187 = arith.constant 2 : index
    %c7_188 = arith.constant 7 : index
    %239 = memref.load %arg1[%c2_187, %c7_188] : memref<3x9xf32, #tpu.memory_space<smem>>
    %c0_189 = arith.constant 0 : index
    %c7_190 = arith.constant 7 : index
    %c0_191 = arith.constant 0 : index
    %240 = vector.load %arg3[%c0_189, %c7_190, %c0_191] : memref<1x9x256xf32, #tpu.memory_space<vmem>>, vector<1x1x256xf32>
    %241 = vector.shape_cast %240 : vector<1x1x256xf32> to vector<1x256xf32>
    %242 = vector.broadcast %239 : f32 to vector<1x256xf32>
    %243 = arith.mulf %242, %241 : vector<1x256xf32>
    %244 = arith.addf %238, %243 : vector<1x256xf32>
    %c2_192 = arith.constant 2 : index
    %c8_193 = arith.constant 8 : index
    %245 = memref.load %arg1[%c2_192, %c8_193] : memref<3x9xf32, #tpu.memory_space<smem>>
    %c0_194 = arith.constant 0 : index
    %c8_195 = arith.constant 8 : index
    %c0_196 = arith.constant 0 : index
    %246 = vector.load %arg3[%c0_194, %c8_195, %c0_196] : memref<1x9x256xf32, #tpu.memory_space<vmem>>, vector<1x1x256xf32>
    %247 = vector.shape_cast %246 : vector<1x1x256xf32> to vector<1x256xf32>
    %248 = vector.broadcast %245 : f32 to vector<1x256xf32>
    %249 = arith.mulf %248, %247 : vector<1x256xf32>
    %250 = arith.addf %244, %249 : vector<1x256xf32>
    %c2_197 = arith.constant 2 : index
    %c0_198 = arith.constant 0 : index
    %251 = memref.load %arg2[%c2_197, %c0_198] : memref<3x6xf32, #tpu.memory_space<smem>>
    %c0_199 = arith.constant 0 : index
    %c0_200 = arith.constant 0 : index
    %c0_201 = arith.constant 0 : index
    %252 = vector.load %arg4[%c0_199, %c0_200, %c0_201] : memref<1x6x256xf32, #tpu.memory_space<vmem>>, vector<1x1x256xf32>
    %253 = vector.shape_cast %252 : vector<1x1x256xf32> to vector<1x256xf32>
    %254 = vector.broadcast %251 : f32 to vector<1x256xf32>
    %255 = arith.mulf %254, %253 : vector<1x256xf32>
    %256 = arith.addf %250, %255 : vector<1x256xf32>
    %c2_202 = arith.constant 2 : index
    %c1_203 = arith.constant 1 : index
    %257 = memref.load %arg2[%c2_202, %c1_203] : memref<3x6xf32, #tpu.memory_space<smem>>
    %c0_204 = arith.constant 0 : index
    %c1_205 = arith.constant 1 : index
    %c0_206 = arith.constant 0 : index
    %258 = vector.load %arg4[%c0_204, %c1_205, %c0_206] : memref<1x6x256xf32, #tpu.memory_space<vmem>>, vector<1x1x256xf32>
    %259 = vector.shape_cast %258 : vector<1x1x256xf32> to vector<1x256xf32>
    %260 = vector.broadcast %257 : f32 to vector<1x256xf32>
    %261 = arith.mulf %260, %259 : vector<1x256xf32>
    %262 = arith.addf %256, %261 : vector<1x256xf32>
    %c2_207 = arith.constant 2 : index
    %c2_208 = arith.constant 2 : index
    %263 = memref.load %arg2[%c2_207, %c2_208] : memref<3x6xf32, #tpu.memory_space<smem>>
    %c0_209 = arith.constant 0 : index
    %c2_210 = arith.constant 2 : index
    %c0_211 = arith.constant 0 : index
    %264 = vector.load %arg4[%c0_209, %c2_210, %c0_211] : memref<1x6x256xf32, #tpu.memory_space<vmem>>, vector<1x1x256xf32>
    %265 = vector.shape_cast %264 : vector<1x1x256xf32> to vector<1x256xf32>
    %266 = vector.broadcast %263 : f32 to vector<1x256xf32>
    %267 = arith.mulf %266, %265 : vector<1x256xf32>
    %268 = arith.addf %262, %267 : vector<1x256xf32>
    %c2_212 = arith.constant 2 : index
    %c3_213 = arith.constant 3 : index
    %269 = memref.load %arg2[%c2_212, %c3_213] : memref<3x6xf32, #tpu.memory_space<smem>>
    %c0_214 = arith.constant 0 : index
    %c3_215 = arith.constant 3 : index
    %c0_216 = arith.constant 0 : index
    %270 = vector.load %arg4[%c0_214, %c3_215, %c0_216] : memref<1x6x256xf32, #tpu.memory_space<vmem>>, vector<1x1x256xf32>
    %271 = vector.shape_cast %270 : vector<1x1x256xf32> to vector<1x256xf32>
    %272 = vector.broadcast %269 : f32 to vector<1x256xf32>
    %273 = arith.mulf %272, %271 : vector<1x256xf32>
    %274 = arith.addf %268, %273 : vector<1x256xf32>
    %c2_217 = arith.constant 2 : index
    %c4_218 = arith.constant 4 : index
    %275 = memref.load %arg2[%c2_217, %c4_218] : memref<3x6xf32, #tpu.memory_space<smem>>
    %c0_219 = arith.constant 0 : index
    %c4_220 = arith.constant 4 : index
    %c0_221 = arith.constant 0 : index
    %276 = vector.load %arg4[%c0_219, %c4_220, %c0_221] : memref<1x6x256xf32, #tpu.memory_space<vmem>>, vector<1x1x256xf32>
    %277 = vector.shape_cast %276 : vector<1x1x256xf32> to vector<1x256xf32>
    %278 = vector.broadcast %275 : f32 to vector<1x256xf32>
    %279 = arith.mulf %278, %277 : vector<1x256xf32>
    %280 = arith.addf %274, %279 : vector<1x256xf32>
    %c2_222 = arith.constant 2 : index
    %c5_223 = arith.constant 5 : index
    %281 = memref.load %arg2[%c2_222, %c5_223] : memref<3x6xf32, #tpu.memory_space<smem>>
    %c0_224 = arith.constant 0 : index
    %c5_225 = arith.constant 5 : index
    %c0_226 = arith.constant 0 : index
    %282 = vector.load %arg4[%c0_224, %c5_225, %c0_226] : memref<1x6x256xf32, #tpu.memory_space<vmem>>, vector<1x1x256xf32>
    %283 = vector.shape_cast %282 : vector<1x1x256xf32> to vector<1x256xf32>
    %284 = vector.broadcast %281 : f32 to vector<1x256xf32>
    %285 = arith.mulf %284, %283 : vector<1x256xf32>
    %286 = arith.addf %280, %285 : vector<1x256xf32>
    %cst_227 = arith.constant 5.000000e-01 : f32
    %287 = vector.broadcast %cst_227 : f32 to vector<1x256xf32>
    %288 = arith.mulf %287, %286 : vector<1x256xf32>
    %289 = math.tanh %288 : vector<1x256xf32>
    %cst_228 = arith.constant 5.000000e-01 : f32
    %290 = vector.broadcast %cst_228 : f32 to vector<1x256xf32>
    %291 = arith.mulf %290, %289 : vector<1x256xf32>
    %cst_229 = arith.constant 5.000000e-01 : f32
    %292 = vector.broadcast %cst_229 : f32 to vector<1x256xf32>
    %293 = arith.addf %291, %292 : vector<1x256xf32>
    %c0_230 = arith.constant 0 : index
    %c2_231 = arith.constant 2 : index
    %c0_232 = arith.constant 0 : index
    %294 = vector.load %arg5[%c0_230, %c2_231, %c0_232] : memref<1x3x256xf32, #tpu.memory_space<vmem>>, vector<1x1x256xf32>
    %295 = vector.shape_cast %294 : vector<1x1x256xf32> to vector<1x256xf32>
    %296 = vector.shape_cast %293 : vector<1x256xf32> to vector<1x1x256xf32>
    tpu.vector_store %arg5[%c0_230, %c2_231, %c0_232], %296 {strides = array<i32>} : memref<1x3x256xf32, #tpu.memory_space<vmem>>, vector<1x1x256xf32>,
    return
  }
  func.func @transform_0(%arg0: i32) -> (i32, i32) {
    %c0_i32 = arith.constant 0 : i32
    %c0_i32_0 = arith.constant 0 : i32
    %c0_i32_1 = arith.constant 0 : i32
    return %c0_i32, %c0_i32_0 : i32, i32
  }
  func.func @transform_1(%arg0: i32) -> (i32, i32) {
    %c0_i32 = arith.constant 0 : i32
    %c0_i32_0 = arith.constant 0 : i32
    %c0_i32_1 = arith.constant 0 : i32
    return %c0_i32, %c0_i32_0 : i32, i32
  }
  func.func @transform_2(%arg0: i32) -> (i32, i32, i32) {
    %c0_i32 = arith.constant 0 : i32
    %c0_i32_0 = arith.constant 0 : i32
    %c0_i32_1 = arith.constant 0 : i32
    return %arg0, %c0_i32, %c0_i32_0 : i32, i32, i32
  }
  func.func @transform_3(%arg0: i32) -> (i32, i32, i32) {
    %c0_i32 = arith.constant 0 : i32
    %c0_i32_0 = arith.constant 0 : i32
    %c0_i32_1 = arith.constant 0 : i32
    return %arg0, %c0_i32, %c0_i32_0 : i32, i32, i32
  }
  func.func @transform_4(%arg0: i32) -> (i32, i32, i32) {
    %c0_i32 = arith.constant 0 : i32
    %c0_i32_0 = arith.constant 0 : i32
    %c0_i32_1 = arith.constant 0 : i32
    return %arg0, %c0_i32, %c0_i32_0 : i32, i32, i32
  }
}

</mosaic_0001>

<llo_original>
// kernel: rgb_decoder_vray_shift.1
$region0: #{rgb_decoder_vray_shift.1}
  #allocation0 [shape = 'u32[]', space=smem, size = 0x4, offset = 0x4, fixed_abs, tag = 'smem constant byte address 0x4 - core index']
  #allocation1 [shape = 'u32[144,128]{1,0:T(1,128)}', space=vmem, size = 0x12000, scoped, tag = 'internal scratch']
  %s0 = inlined_call_operand.vmem [shape: f32[3,9], index: 0, kind: input, shape index: {}]
  %s1 = inlined_call_operand.vmem [shape: f32[3,6], index: 1, kind: input, shape index: {}]
  %s2 = inlined_call_operand.vmem [shape: f32[2,9,256], index: 2, kind: input, shape index: {}]
  %s3 = inlined_call_operand.vmem [shape: f32[2,6,256], index: 3, kind: input, shape index: {}]
  %s4 = inlined_call_operand.vmem [shape: f32[2,3,256], index: 4, kind: output, shape index: {}]
  %s5 = sld [smem:[#allocation0]]
  $region57: #{rgb_decoder_vray_shift.1} parent=0
    _
  %s7 = ssub.s32 1, %s5
  %s8 = scalar_select 0, %s7, %s5
  $region1: #{rgb_decoder_vray_shift.1} parent=0
    #allocation2 [shape = 'u8[2048]{0}', space=smem, size = 0x800, scoped, tag = 'input window, operand 0, single buffered']
    #allocation3 [shape = 's32[2]{0}', space=sflag, size = 0x8, scoped, tag = 'scoped memory for rgb_decoder_vray_shift.1']
    #allocation4 [shape = 'u8[2048]{0}', space=smem, size = 0x800, scoped, tag = 'input window, operand 1, single buffered']
    #allocation5 [shape = 's32[1]{0}', space=sflag, size = 0x4, scoped, tag = 'scoped memory for rgb_decoder_vray_shift.1']
    %9 = vsyncpa [#allocation3], 0
    %10 = vsyncpa [#allocation5], 0
    loop: start=0, step=1, limit=4
    $region2: #{rgb_decoder_vray_shift.1} parent=1 // loop_pre_header
      _
    $region3: #{rgb_decoder_vray_shift.1} parent=1 // loop_header
      %s12 = sphi 0, %s16
      %p13 = scmp.ge.s32.totalorder %s12, 4
      %s20 = sphi 0, %s20
      %s22 = sphi 0, %s20
      %s23 = sphi 0, %s22
      %s37 = sphi 0, %s23
      %s41 = sphi 0, %s41
      %s43 = sphi 0, %s41
      %s44 = sphi 0, %s43
      %s58 = sphi 0, %s44
      %s64 = sphi 0, %s66
      %s67 = sphi 0, %s64
      %s68 = sphi 0, %s67
      %s84 = sphi 0, %s68
      %s90 = sphi 0, %s92
      %s93 = sphi 0, %s90
      %s94 = sphi 0, %s93
      %s110 = sphi 0, %s94
      %s116 = sphi 0, %s118
      %s119 = sphi 0, %s116
      %s120 = sphi 0, %s119
      %s136 = sphi 0, %s120
    $region4: #{rgb_decoder_vray_shift.1} parent=1 // loop_header_branch
      %15 = sbr.rel (%p13) target = $region8
    $region5: #{rgb_decoder_vray_shift.1} parent=1 // loop_body
      %s17 = ssub.s32 %s12, 1
      %s18 = ssub.s32 %s12, 2
      %s19 = sadd.s32 %s12, 1
      %s21 = sadd.s32 %s20, 1
      %p24 = scmp.eq.s32.totalorder %s12, 1
      %p25 = scmp.ne.s32.totalorder %s20, %s22
      %p26 = scmp.eq.s32.totalorder %s12, 0
      %p27 = por %p25, %p26
      %p28 = scmp.ne.s32.totalorder %s20, %s22
      %p29 = scmp.eq.s32.totalorder %s17, 1
      %p30 = por %p28, %p29
      %p31 = scmp.ne.s32.totalorder %s22, %s23
      %p32 = scmp.eq.s32.totalorder %s17, 0
      %p33 = por %p31, %p32
      %p34 = scmp.ne.s32.totalorder %s22, %s23
      %p35 = scmp.eq.s32.totalorder %s18, 1
      %p36 = por %p34, %p35
      %p38 = scmp.ne.s32.totalorder %s23, %s37
      %p39 = scmp.eq.s32.totalorder %s18, 0
      %p40 = por %p38, %p39
      %s42 = sadd.s32 %s41, 1
      %p45 = scmp.eq.s32.totalorder %s12, 1
      %p46 = scmp.ne.s32.totalorder %s41, %s43
      %p47 = scmp.eq.s32.totalorder %s12, 0
      %p48 = por %p46, %p47
      %p49 = scmp.ne.s32.totalorder %s41, %s43
      %p50 = scmp.eq.s32.totalorder %s17, 1
      %p51 = por %p49, %p50
      %p52 = scmp.ne.s32.totalorder %s43, %s44
      %p53 = scmp.eq.s32.totalorder %s17, 0
      %p54 = por %p52, %p53
      %p55 = scmp.ne.s32.totalorder %s43, %s44
      %p56 = scmp.eq.s32.totalorder %s18, 1
      %p57 = por %p55, %p56
      %p59 = scmp.ne.s32.totalorder %s44, %s58
      %p60 = scmp.eq.s32.totalorder %s18, 0
      %p61 = por %p59, %p60
      %s62 = ssub.s32 %s12, %s19
      %p63 = scmp.eq.s32.totalorder %s62, 0
      %s65 = sadd.s32 %s64, 1
      %s66 = scalar_select %p63, %s64, %s65
      %p69 = pneg %p63
      %p70 = scmp.eq.s32.totalorder %s12, 1
      %p71 = por %p69, %p70
      %p72 = scmp.ne.s32.totalorder %s64, %s67
      %p73 = scmp.eq.s32.totalorder %s12, 0
      %p74 = por %p72, %p73
      %p75 = scmp.ne.s32.totalorder %s64, %s67
      %p76 = scmp.eq.s32.totalorder %s17, 1
      %p77 = por %p75, %p76
      %p78 = scmp.ne.s32.totalorder %s67, %s68
      %p79 = scmp.eq.s32.totalorder %s17, 0
      %p80 = por %p78, %p79
      %p81 = scmp.ne.s32.totalorder %s67, %s68
      %p82 = scmp.eq.s32.totalorder %s18, 1
      %p83 = por %p81, %p82
      %p85 = scmp.ne.s32.totalorder %s68, %s84
      %p86 = scmp.eq.s32.totalorder %s18, 0
      %p87 = por %p85, %p86
      %s88 = ssub.s32 %s12, %s19
      %p89 = scmp.eq.s32.totalorder %s88, 0
      %s91 = sadd.s32 %s90, 1
      %s92 = scalar_select %p89, %s90, %s91
      %p95 = pneg %p89
      %p96 = scmp.eq.s32.totalorder %s12, 1
      %p97 = por %p95, %p96
      %p98 = scmp.ne.s32.totalorder %s90, %s93
      %p99 = scmp.eq.s32.totalorder %s12, 0
      %p100 = por %p98, %p99
      %p101 = scmp.ne.s32.totalorder %s90, %s93
      %p102 = scmp.eq.s32.totalorder %s17, 1
      %p103 = por %p101, %p102
      %p104 = scmp.ne.s32.totalorder %s93, %s94
      %p105 = scmp.eq.s32.totalorder %s17, 0
      %p106 = por %p104, %p105
      %p107 = scmp.ne.s32.totalorder %s93, %s94
      %p108 = scmp.eq.s32.totalorder %s18, 1
      %p109 = por %p107, %p108
      %p111 = scmp.ne.s32.totalorder %s94, %s110
      %p112 = scmp.eq.s32.totalorder %s18, 0
      %p113 = por %p111, %p112
      %s114 = ssub.s32 %s12, %s19
      %p115 = scmp.eq.s32.totalorder %s114, 0
      %s117 = sadd.s32 %s116, 1
      %s118 = scalar_select %p115, %s116, %s117
      %p121 = pneg %p115
      %p122 = scmp.eq.s32.totalorder %s12, 1
      %p123 = por %p121, %p122
      %p124 = scmp.ne.s32.totalorder %s116, %s119
      %p125 = scmp.eq.s32.totalorder %s12, 0
      %p126 = por %p124, %p125
      %p127 = scmp.ne.s32.totalorder %s116, %s119
      %p128 = scmp.eq.s32.totalorder %s17, 1
      %p129 = por %p127, %p128
      %p130 = scmp.ne.s32.totalorder %s119, %s120
      %p131 = scmp.eq.s32.totalorder %s17, 0
      %p132 = por %p130, %p131
      %p133 = scmp.ne.s32.totalorder %s119, %s120
      %p134 = scmp.eq.s32.totalorder %s18, 1
      %p135 = por %p133, %p134
      %p137 = scmp.ne.s32.totalorder %s120, %s136
      %p138 = scmp.eq.s32.totalorder %s18, 0
      %p139 = por %p137, %p138
      %p140 = scmp.le.s32.totalorder 1, %s12
      %p141 = scmp.lt.s32.totalorder %s12, 3
      %p142 = pnand %p140, %p141
      %p143 = pneg %p142
      // Predicated region
      $region9: #{rgb_decoder_vray_shift.1} parent=5 // pred_check
        _
      $region10: #{rgb_decoder_vray_shift.1} parent=5 // pred_check_branch
        %145 = sbr.rel (%p142) target = $region12
      $region11: #{rgb_decoder_vray_shift.1} parent=5 // pred_region
        %s146 = ssub.s32 %s12, 1
        // Predicated region
        $region13: #{rgb_decoder_vray_shift.1} parent=11 // pred_check
          %p147 = pneg %p33
        $region14: #{rgb_decoder_vray_shift.1} parent=11 // pred_check_branch
          %149 = sbr.rel (%p147) target = $region16
        $region15: #{rgb_decoder_vray_shift.1} parent=11 // pred_region
          %s151 = ssub.s32 64, 64
          %152 = vsyncadd [#allocation3], %s151
          %s154 = sshll.u32 %s0, 4
          %s155 = int_to_ptr.vmem [resolvable:$true] %s154
          %157 = dma.vmem_to_smem %s155, 64, [#allocation2], [#allocation3]
        $region16: #{rgb_decoder_vray_shift.1} parent=11 // pred_fallthru
          _
        // Predicated region
        $region17: #{rgb_decoder_vray_shift.1} parent=11 // pred_check
          %p158 = pneg %p54
        $region18: #{rgb_decoder_vray_shift.1} parent=11 // pred_check_branch
          %160 = sbr.rel (%p158) target = $region20
        $region19: #{rgb_decoder_vray_shift.1} parent=11 // pred_region
          %s162 = ssub.s32 64, 64
          %163 = vsyncadd [#allocation5], %s162
          %s165 = sshll.u32 %s1, 4
          %s166 = int_to_ptr.vmem [resolvable:$true] %s165
          %168 = dma.vmem_to_smem %s166, 64, [#allocation4], [#allocation5]
        $region20: #{rgb_decoder_vray_shift.1} parent=11 // pred_fallthru
          _
      $region12: #{rgb_decoder_vray_shift.1} parent=5 // pred_fallthru
        _
      %p169 = scmp.lt.s32.totalorder %s12, 2
      // Predicated region
      $region21: #{rgb_decoder_vray_shift.1} parent=5 // pred_check
        %p170 = pneg %p169
      $region22: #{rgb_decoder_vray_shift.1} parent=5 // pred_check_branch
        %172 = sbr.rel (%p170) target = $region24
      $region23: #{rgb_decoder_vray_shift.1} parent=5 // pred_region
        // Predicated region
        $region25: #{rgb_decoder_vray_shift.1} parent=23 // pred_check
          %p173 = pneg %p74
        $region26: #{rgb_decoder_vray_shift.1} parent=23 // pred_check_branch
          %175 = sbr.rel (%p173) target = $region28
        $region27: #{rgb_decoder_vray_shift.1} parent=23 // pred_region
          %p176 = scmp.lt.s32.totalorder %s12, 1
          %s177 = scalar_select %p176, %s12, 1
          %s178 = smul.addr %s177, 4
          %s179 = smul.addr %s178, 8
          %s180 = scalar_lea.vmem %s2, %s179
        $region28: #{rgb_decoder_vray_shift.1} parent=23 // pred_fallthru
          _
        // Predicated region
        $region29: #{rgb_decoder_vray_shift.1} parent=23 // pred_check
          %p181 = pneg %p100
        $region30: #{rgb_decoder_vray_shift.1} parent=23 // pred_check_branch
          %183 = sbr.rel (%p181) target = $region32
        $region31: #{rgb_decoder_vray_shift.1} parent=23 // pred_region
          %p184 = scmp.lt.s32.totalorder %s12, 1
          %s185 = scalar_select %p184, %s12, 1
          %s186 = smul.addr %s185, 2
          %s187 = smul.addr %s186, 8
          %s188 = scalar_lea.vmem %s3, %s187
        $region32: #{rgb_decoder_vray_shift.1} parent=23 // pred_fallthru
          _
      $region24: #{rgb_decoder_vray_shift.1} parent=5 // pred_fallthru
        _
      %p189 = scmp.le.s32.totalorder 1, %s12
      %p190 = scmp.lt.s32.totalorder %s12, 3
      %p191 = pnand %p189, %p190
      %p192 = pneg %p191
      // Predicated region
      $region33: #{rgb_decoder_vray_shift.1} parent=5 // pred_check
        _
      $region34: #{rgb_decoder_vray_shift.1} parent=5 // pred_check_branch
        %194 = sbr.rel (%p191) target = $region36
      $region35: #{rgb_decoder_vray_shift.1} parent=5 // pred_region
        %s195 = ssub.s32 %s12, 1
        // Predicated region
        $region37: #{rgb_decoder_vray_shift.1} parent=35 // pred_check
          %p196 = pneg %p33
        $region38: #{rgb_decoder_vray_shift.1} parent=35 // pred_check_branch
          %198 = sbr.rel (%p196) target = $region40
        $region39: #{rgb_decoder_vray_shift.1} parent=35 // pred_region
          %199 = dma.done [#allocation3], 64
        $region40: #{rgb_decoder_vray_shift.1} parent=35 // pred_fallthru
          _
        // Predicated region
        $region41: #{rgb_decoder_vray_shift.1} parent=35 // pred_check
          %p200 = pneg %p54
        $region42: #{rgb_decoder_vray_shift.1} parent=35 // pred_check_branch
          %202 = sbr.rel (%p200) target = $region44
        $region43: #{rgb_decoder_vray_shift.1} parent=35 // pred_region
          %203 = dma.done [#allocation5], 64
        $region44: #{rgb_decoder_vray_shift.1} parent=35 // pred_fallthru
          _
        %204 = sfence
        %p205 = pneg %p33
        %p206 = pneg %p30
        %p207 = pneg %p54
        %p208 = pneg %p51
        %p209 = scmp.lt.s32.totalorder %s17, 1
        %s210 = scalar_select %p209, %s17, 1
        %s211 = smul.addr %s210, 4
        %s212 = smul.addr %s211, 8
        %s213 = scalar_lea.vmem %s2, %s212
        %p214 = pneg %p80
        %p215 = pneg %p77
        %p216 = scmp.lt.s32.totalorder %s17, 1
        %s217 = scalar_select %p216, %s17, 1
        %s218 = smul.addr %s217, 2
        %s219 = smul.addr %s218, 8
        %s220 = scalar_lea.vmem %s3, %s219
        %p221 = pneg %p106
        %p222 = pneg %p103
        %p223 = pneg %p132
        %p224 = pneg %p129
        %p225 = scmp.lt.s32.totalorder %s17, 1
        %s226 = scalar_select %p225, %s17, 1
        %s227 = smul.addr %s226, 2
        %s228 = smul.addr %s227, 4
        %s229 = scalar_lea.vmem %s4, %s228
        %p230 = scmp.lt.s32.totalorder %s17, 1
        %s231 = scalar_select %p230, %s17, 1
        %s232 = smul.addr %s231, 4
        %s233 = smul.addr %s232, 8
        %s234 = scalar_lea.vmem %s2, %s233
        %p235 = scmp.lt.s32.totalorder %s17, 1
        %s236 = scalar_select %p235, %s17, 1
        %s237 = smul.addr %s236, 2
        %s238 = smul.addr %s237, 8
        %s239 = scalar_lea.vmem %s3, %s238
        %p240 = scmp.lt.s32.totalorder %s17, 1
        %s241 = scalar_select %p240, %s17, 1
        %s242 = smul.addr %s241, 2
        %s243 = smul.addr %s242, 4
        %s244 = scalar_lea.vmem %s4, %s243
        %s245 = sld [smem:[#allocation2]]
        %v246 = vld [vmem:[%s234] ss:$8 sm:$0x3]
        %v247 = vstv %s245
        %v248 = vmul.f32 %v247, %v246
        %s249 = sld [smem:[#allocation2 + $0x1]]
        %s250 = scalar_lea.vmem %s234, 1
        %v251 = vld [vmem:[%s250] ss:$8 sm:$0x3]
        %v252 = vstv %s249
        %v253 = vmul.f32 %v252, %v251
        %v254 = vadd.f32 %v248, %v253
        %s255 = sld [smem:[#allocation2 + $0x2]]
        %s256 = scalar_lea.vmem %s234, 2
        %v257 = vld [vmem:[%s256] ss:$8 sm:$0x3]
        %v258 = vstv %s255
        %v259 = vmul.f32 %v258, %v257
        %v260 = vadd.f32 %v254, %v259
        %s261 = sld [smem:[#allocation2 + $0x3]]
        %s262 = scalar_lea.vmem %s234, 3
        %v263 = vld [vmem:[%s262] ss:$8 sm:$0x3]
        %v264 = vstv %s261
        %v265 = vmul.f32 %v264, %v263
        %v266 = vadd.f32 %v260, %v265
        %s267 = sld [smem:[#allocation2 + $0x4]]
        %s268 = scalar_lea.vmem %s234, 4
        %v269 = vld [vmem:[%s268] ss:$8 sm:$0x3]
        %v270 = vstv %s267
        %v271 = vmul.f32 %v270, %v269
        %v272 = vadd.f32 %v266, %v271
        %s273 = sld [smem:[#allocation2 + $0x5]]
        %s274 = scalar_lea.vmem %s234, 5
        %v275 = vld [vmem:[%s274] ss:$8 sm:$0x3]
        %v276 = vstv %s273
        %v277 = vmul.f32 %v276, %v275
        %v278 = vadd.f32 %v272, %v277
        %s279 = sld [smem:[#allocation2 + $0x6]]
        %s280 = scalar_lea.vmem %s234, 6
        %v281 = vld [vmem:[%s280] ss:$8 sm:$0x3]
        %v282 = vstv %s279
        %v283 = vmul.f32 %v282, %v281
        %v284 = vadd.f32 %v278, %v283
        %s285 = sld [smem:[#allocation2 + $0x7]]
        %s286 = scalar_lea.vmem %s234, 7
        %v287 = vld [vmem:[%s286] ss:$8 sm:$0x3]
        %v288 = vstv %s285
        %v289 = vmul.f32 %v288, %v287
        %v290 = vadd.f32 %v284, %v289
        %s291 = sld [smem:[#allocation2 + $0x8]]
        %s292 = scalar_lea.vmem %s234, 16
        %v293 = vld [vmem:[%s292] ss:$8 sm:$0x3]
        %v294 = vstv %s291
        %v295 = vmul.f32 %v294, %v293
        %v296 = vadd.f32 %v290, %v295
        %s297 = sld [smem:[#allocation4]]
        %v298 = vld [vmem:[%s239] ss:$8 sm:$0x3]
        %v299 = vstv %s297
        %v300 = vmul.f32 %v299, %v298
        %v301 = vadd.f32 %v296, %v300
        %s302 = sld [smem:[#allocation4 + $0x1]]
        %s303 = scalar_lea.vmem %s239, 1
        %v304 = vld [vmem:[%s303] ss:$8 sm:$0x3]
        %v305 = vstv %s302
        %v306 = vmul.f32 %v305, %v304
        %v307 = vadd.f32 %v301, %v306
        %s308 = sld [smem:[#allocation4 + $0x2]]
        %s309 = scalar_lea.vmem %s239, 2
        %v310 = vld [vmem:[%s309] ss:$8 sm:$0x3]
        %v311 = vstv %s308
        %v312 = vmul.f32 %v311, %v310
        %v313 = vadd.f32 %v307, %v312
        %s314 = sld [smem:[#allocation4 + $0x3]]
        %s315 = scalar_lea.vmem %s239, 3
        %v316 = vld [vmem:[%s315] ss:$8 sm:$0x3]
        %v317 = vstv %s314
        %v318 = vmul.f32 %v317, %v316
        %v319 = vadd.f32 %v313, %v318
        %s320 = sld [smem:[#allocation4 + $0x4]]
        %s321 = scalar_lea.vmem %s239, 4
        %v322 = vld [vmem:[%s321] ss:$8 sm:$0x3]
        %v323 = vstv %s320
        %v324 = vmul.f32 %v323, %v322
        %v325 = vadd.f32 %v319, %v324
        %s326 = sld [smem:[#allocation4 + $0x5]]
        %s327 = scalar_lea.vmem %s239, 5
        %v328 = vld [vmem:[%s327] ss:$8 sm:$0x3]
        %v329 = vstv %s326
        %v330 = vmul.f32 %v329, %v328
        %v331 = vadd.f32 %v325, %v330
        %v332 = vmul.f32 %v331, 0.5
        %v333 = vtanh.pop %v332
        %v334 = vmul.f32 %v333, 0.5
        %v335 = vadd.f32 %v334, 0.5
        %v336 = vlaneseq
        %vm337 = vcmp.ge.s32.totalorder %v336, 0
        %vm338 = vcmp.lt.s32.totalorder %v336, 256
        %vm339 = vmand %vm337, %vm338
        %340 = vst.msk [vmem:[%s244] ss:$4 sm:$0x3] %vm339, %v335
        %s341 = sld [smem:[#allocation2 + $0x80]]
        %v342 = vld [vmem:[%s234] ss:$8 sm:$0x3]
        %v343 = vstv %s341
        %v344 = vmul.f32 %v343, %v342
        %s345 = sld [smem:[#allocation2 + $0x81]]
        %v346 = vld [vmem:[%s250] ss:$8 sm:$0x3]
        %v347 = vstv %s345
        %v348 = vmul.f32 %v347, %v346
        %v349 = vadd.f32 %v344, %v348
        %s350 = sld [smem:[#allocation2 + $0x82]]
        %v351 = vld [vmem:[%s256] ss:$8 sm:$0x3]
        %v352 = vstv %s350
        %v353 = vmul.f32 %v352, %v351
        %v354 = vadd.f32 %v349, %v353
        %s355 = sld [smem:[#allocation2 + $0x83]]
        %v356 = vld [vmem:[%s262] ss:$8 sm:$0x3]
        %v357 = vstv %s355
        %v358 = vmul.f32 %v357, %v356
        %v359 = vadd.f32 %v354, %v358
        %s360 = sld [smem:[#allocation2 + $0x84]]
        %v361 = vld [vmem:[%s268] ss:$8 sm:$0x3]
        %v362 = vstv %s360
        %v363 = vmul.f32 %v362, %v361
        %v364 = vadd.f32 %v359, %v363
        %s365 = sld [smem:[#allocation2 + $0x85]]
        %v366 = vld [vmem:[%s274] ss:$8 sm:$0x3]
        %v367 = vstv %s365
        %v368 = vmul.f32 %v367, %v366
        %v369 = vadd.f32 %v364, %v368
        %s370 = sld [smem:[#allocation2 + $0x86]]
        %v371 = vld [vmem:[%s280] ss:$8 sm:$0x3]
        %v372 = vstv %s370
        %v373 = vmul.f32 %v372, %v371
        %v374 = vadd.f32 %v369, %v373
        %s375 = sld [smem:[#allocation2 + $0x87]]
        %v376 = vld [vmem:[%s286] ss:$8 sm:$0x3]
        %v377 = vstv %s375
        %v378 = vmul.f32 %v377, %v376
        %v379 = vadd.f32 %v374, %v378
        %s380 = sld [smem:[#allocation2 + $0x88]]
        %v381 = vld [vmem:[%s292] ss:$8 sm:$0x3]
        %v382 = vstv %s380
        %v383 = vmul.f32 %v382, %v381
        %v384 = vadd.f32 %v379, %v383
        %s385 = sld [smem:[#allocation4 + $0x80]]
        %v386 = vld [vmem:[%s239] ss:$8 sm:$0x3]
        %v387 = vstv %s385
        %v388 = vmul.f32 %v387, %v386
        %v389 = vadd.f32 %v384, %v388
        %s390 = sld [smem:[#allocation4 + $0x81]]
        %v391 = vld [vmem:[%s303] ss:$8 sm:$0x3]
        %v392 = vstv %s390
        %v393 = vmul.f32 %v392, %v391
        %v394 = vadd.f32 %v389, %v393
        %s395 = sld [smem:[#allocation4 + $0x82]]
        %v396 = vld [vmem:[%s309] ss:$8 sm:$0x3]
        %v397 = vstv %s395
        %v398 = vmul.f32 %v397, %v396
        %v399 = vadd.f32 %v394, %v398
        %s400 = sld [smem:[#allocation4 + $0x83]]
        %v401 = vld [vmem:[%s315] ss:$8 sm:$0x3]
        %v402 = vstv %s400
        %v403 = vmul.f32 %v402, %v401
        %v404 = vadd.f32 %v399, %v403
        %s405 = sld [smem:[#allocation4 + $0x84]]
        %v406 = vld [vmem:[%s321] ss:$8 sm:$0x3]
        %v407 = vstv %s405
        %v408 = vmul.f32 %v407, %v406
        %v409 = vadd.f32 %v404, %v408
        %s410 = sld [smem:[#allocation4 + $0x85]]
        %v411 = vld [vmem:[%s327] ss:$8 sm:$0x3]
        %v412 = vstv %s410
        %v413 = vmul.f32 %v412, %v411
        %v414 = vadd.f32 %v409, %v413
        %v415 = vmul.f32 %v414, 0.5
        %v416 = vtanh.pop %v415
        %v417 = vmul.f32 %v416, 0.5
        %v418 = vadd.f32 %v417, 0.5
        %s419 = scalar_lea.vmem %s244, 1
        %420 = vst.msk [vmem:[%s419] ss:$4 sm:$0x3] %vm339, %v418
        %s421 = sld [smem:[#allocation2 + $0x100]]
        %v422 = vld [vmem:[%s234] ss:$8 sm:$0x3]
        %v423 = vstv %s421
        %v424 = vmul.f32 %v423, %v422
        %s425 = sld [smem:[#allocation2 + $0x101]]
        %v426 = vld [vmem:[%s250] ss:$8 sm:$0x3]
        %v427 = vstv %s425
        %v428 = vmul.f32 %v427, %v426
        %v429 = vadd.f32 %v424, %v428
        %s430 = sld [smem:[#allocation2 + $0x102]]
        %v431 = vld [vmem:[%s256] ss:$8 sm:$0x3]
        %v432 = vstv %s430
        %v433 = vmul.f32 %v432, %v431
        %v434 = vadd.f32 %v429, %v433
        %s435 = sld [smem:[#allocation2 + $0x103]]
        %v436 = vld [vmem:[%s262] ss:$8 sm:$0x3]
        %v437 = vstv %s435
        %v438 = vmul.f32 %v437, %v436
        %v439 = vadd.f32 %v434, %v438
        %s440 = sld [smem:[#allocation2 + $0x104]]
        %v441 = vld [vmem:[%s268] ss:$8 sm:$0x3]
        %v442 = vstv %s440
        %v443 = vmul.f32 %v442, %v441
        %v444 = vadd.f32 %v439, %v443
        %s445 = sld [smem:[#allocation2 + $0x105]]
        %v446 = vld [vmem:[%s274] ss:$8 sm:$0x3]
        %v447 = vstv %s445
        %v448 = vmul.f32 %v447, %v446
        %v449 = vadd.f32 %v444, %v448
        %s450 = sld [smem:[#allocation2 + $0x106]]
        %v451 = vld [vmem:[%s280] ss:$8 sm:$0x3]
        %v452 = vstv %s450
        %v453 = vmul.f32 %v452, %v451
        %v454 = vadd.f32 %v449, %v453
        %s455 = sld [smem:[#allocation2 + $0x107]]
        %v456 = vld [vmem:[%s286] ss:$8 sm:$0x3]
        %v457 = vstv %s455
        %v458 = vmul.f32 %v457, %v456
        %v459 = vadd.f32 %v454, %v458
        %s460 = sld [smem:[#allocation2 + $0x108]]
        %v461 = vld [vmem:[%s292] ss:$8 sm:$0x3]
        %v462 = vstv %s460
        %v463 = vmul.f32 %v462, %v461
        %v464 = vadd.f32 %v459, %v463
        %s465 = sld [smem:[#allocation4 + $0x100]]
        %v466 = vld [vmem:[%s239] ss:$8 sm:$0x3]
        %v467 = vstv %s465
        %v468 = vmul.f32 %v467, %v466
        %v469 = vadd.f32 %v464, %v468
        %s470 = sld [smem:[#allocation4 + $0x101]]
        %v471 = vld [vmem:[%s303] ss:$8 sm:$0x3]
        %v472 = vstv %s470
        %v473 = vmul.f32 %v472, %v471
        %v474 = vadd.f32 %v469, %v473
        %s475 = sld [smem:[#allocation4 + $0x102]]
        %v476 = vld [vmem:[%s309] ss:$8 sm:$0x3]
        %v477 = vstv %s475
        %v478 = vmul.f32 %v477, %v476
        %v479 = vadd.f32 %v474, %v478
        %s480 = sld [smem:[#allocation4 + $0x103]]
        %v481 = vld [vmem:[%s315] ss:$8 sm:$0x3]
        %v482 = vstv %s480
        %v483 = vmul.f32 %v482, %v481
        %v484 = vadd.f32 %v479, %v483
        %s485 = sld [smem:[#allocation4 + $0x104]]
        %v486 = vld [vmem:[%s321] ss:$8 sm:$0x3]
        %v487 = vstv %s485
        %v488 = vmul.f32 %v487, %v486
        %v489 = vadd.f32 %v484, %v488
        %s490 = sld [smem:[#allocation4 + $0x105]]
        %v491 = vld [vmem:[%s327] ss:$8 sm:$0x3]
        %v492 = vstv %s490
        %v493 = vmul.f32 %v492, %v491
        %v494 = vadd.f32 %v489, %v493
        %v495 = vmul.f32 %v494, 0.5
        %v496 = vtanh.pop %v495
        %v497 = vmul.f32 %v496, 0.5
        %v498 = vadd.f32 %v497, 0.5
        %s499 = scalar_lea.vmem %s244, 2
        %500 = vst.msk [vmem:[%s499] ss:$4 sm:$0x3] %vm339, %v498
        %p501 = scmp.lt.s32.totalorder %s17, 1
        %s502 = scalar_select %p501, %s17, 1
        %s503 = smul.addr %s502, 2
        %s504 = smul.addr %s503, 4
        %s505 = scalar_lea.vmem %s4, %s504
        // Predicated region
        $region45: #{rgb_decoder_vray_shift.1} parent=35 // pred_check
          %p506 = pneg %p129
        $region46: #{rgb_decoder_vray_shift.1} parent=35 // pred_check_branch
          %508 = sbr.rel (%p506) target = $region48
        $region47: #{rgb_decoder_vray_shift.1} parent=35 // pred_region
          _
        $region48: #{rgb_decoder_vray_shift.1} parent=35 // pred_fallthru
          _
      $region36: #{rgb_decoder_vray_shift.1} parent=5 // pred_fallthru
        _
      %p509 = scmp.le.s32.totalorder 2, %s12
      // Predicated region
      $region49: #{rgb_decoder_vray_shift.1} parent=5 // pred_check
        %p510 = pneg %p509
      $region50: #{rgb_decoder_vray_shift.1} parent=5 // pred_check_branch
        %512 = sbr.rel (%p510) target = $region52
      $region51: #{rgb_decoder_vray_shift.1} parent=5 // pred_region
        %s513 = ssub.s32 %s12, 2
        // Predicated region
        $region53: #{rgb_decoder_vray_shift.1} parent=51 // pred_check
          %p514 = pneg %p135
        $region54: #{rgb_decoder_vray_shift.1} parent=51 // pred_check_branch
          %516 = sbr.rel (%p514) target = $region56
        $region55: #{rgb_decoder_vray_shift.1} parent=51 // pred_region
          %p517 = scmp.lt.s32.totalorder %s18, 1
          %s518 = scalar_select %p517, %s18, 1
          %s519 = smul.addr %s518, 2
          %s520 = smul.addr %s519, 4
          %s521 = scalar_lea.vmem %s4, %s520
        $region56: #{rgb_decoder_vray_shift.1} parent=51 // pred_fallthru
          _
      $region52: #{rgb_decoder_vray_shift.1} parent=5 // pred_fallthru
        _
    $region6: #{rgb_decoder_vray_shift.1} parent=1 // loop_footer
      %s16 = sadd.s32 1, %s12
    $region7: #{rgb_decoder_vray_shift.1} parent=1 // loop_footer_branch
      %11 = sbr.rel target = $region3
    $region8: #{rgb_decoder_vray_shift.1} parent=1 // loop_exit
      _
    %522 = vsyncpa [#allocation3], 1
    %s523 = scalar_lea.sflag [#allocation3], 1
    %524 = vsyncpa %s523, 1
    %525 = vsyncpa [#allocation5], 1

</llo_original>
